<compile_context>
chip_gen: v5e
topology: v5e:2x2
jax: 0.10.0
libtpu: 0.0.40
codegen_flags: <defaults>
</compile_context>

<pallas_src>
import functools

import jax
import jax.numpy as jnp
from jax.experimental import pallas as pl
from jax.experimental.pallas import tpu as pltpu


def _round_up(v, m):
    return (v + m - 1) // m * m


def _patch_proj_kernel(x_ref, w_ref, b_ref, o_ref):
    # x_ref: (TM, Kp) bf16   patch-matrix tile
    # w_ref: (Kp, Ep) bf16   flattened conv weight (whole, constant-index)
    # b_ref: (1,  Ep) f32    bias
    # o_ref: (TM, Ep) f32    output tile
    acc = jnp.dot(x_ref[...], w_ref[...], preferred_element_type=jnp.float32)
    o_ref[...] = (acc + b_ref[...]).astype(o_ref.dtype)


@functools.partial(jax.jit, static_argnames=("patch_size", "tile_m"))
def patch_embedding_forward(x, weight, bias, patch_size, tile_m=512):
    """x: (B, Win, C, H, W) f32; weight: (E, C, P, P) f32; bias: (E,) f32."""
    B, Win, C, H, W = x.shape
    E = weight.shape[0]
    P = patch_size
    assert H % P == 0 and W % P == 0
    nh, nw = H // P, W // P
    num_patches = nh * nw
    N = B * Win
    M = N * num_patches
    K = C * P * P

    # Lane-dense padding: contraction dim K and output dim E rounded up to x128.
    Kp = _round_up(K, 128)
    Ep = _round_up(E, 128)

    # ---- glue: patchify in bf16 (K ordering (C, ph, pw) == Conv2d weight flatten) ----
    # TODO(synk): fuse the patchify transpose into the kernel input DMA
    # (in-kernel patchify or allow_input_fusion) to remove this extra HBM pass.
    xr = x.reshape(N, C, nh, P, nw, P)
    xr = jnp.transpose(xr, (0, 2, 4, 1, 3, 5))            # (N, nh, nw, C, P, P)
    x_patches = xr.reshape(M, K).astype(jnp.bfloat16)      # (M, K) bf16
    if Kp != K:
        x_patches = jnp.pad(x_patches, ((0, 0), (0, Kp - K)))

    w_flat = weight.reshape(E, K).T.astype(jnp.bfloat16)   # (K, E) bf16
    if Kp != K or Ep != E:
        w_flat = jnp.pad(w_flat, ((0, Kp - K), (0, Ep - E)))
    b_flat = bias.astype(jnp.float32).reshape(1, E)
    if Ep != E:
        b_flat = jnp.pad(b_flat, ((0, 0), (0, Ep - E)))

    # ---- Pallas hot path: M-tiled projection, pipelined + megacore-parallel ----
    tm = M if M <= tile_m else tile_m          # tile_m is a multiple of 8

    out = pl.pallas_call(
        _patch_proj_kernel,
        out_shape=jax.ShapeDtypeStruct((M, Ep), x.dtype),
        grid_spec=pltpu.PrefetchScalarGridSpec(
            num_scalar_prefetch=0,
            grid=(pl.cdiv(M, tm),),
            in_specs=[
                pl.BlockSpec((tm, Kp), lambda i: (i, 0)),   # streamed over M
                pl.BlockSpec((Kp, Ep), lambda i: (0, 0)),   # weight: resident
                pl.BlockSpec((1, Ep), lambda i: (0, 0)),    # bias: resident
            ],
            out_specs=pl.BlockSpec((tm, Ep), lambda i: (i, 0)),
        ),
        compiler_params=pltpu.CompilerParams(
            dimension_semantics=("parallel",),               # v7x: shard M over 2 TCs
            vmem_limit_bytes=32 * 1024 * 1024,               # tiles sized to fit easily
        ),
    )(x_patches, w_flat, b_flat)

    # ---- glue: drop E padding, back to (B*Win, num_patches, emb_size) ----
    if Ep != E:
        out = out[:, :E]
    return out.reshape(N, num_patches, E)


if __name__ == "__main__":
    # Small, module-consistent shapes.
    batch, window = 2, 2
    in_channels = 3
    img_size = 16
    patch_size = 8
    emb_size = 32

    key = jax.random.PRNGKey(0)
    kx, kw, kb = jax.random.split(key, 3)

    x = jax.random.normal(
        kx, (batch, window, in_channels, img_size, img_size), dtype=jnp.float32)
    # Deterministic synthetic Conv2d params (emb, C, P, P) and (emb,)
    weight = jax.random.normal(
        kw, (emb_size, in_channels, patch_size, patch_size), dtype=jnp.float32) * 0.02
    bias = jax.random.normal(kb, (emb_size,), dtype=jnp.float32) * 0.02

    out = patch_embedding_forward(x, weight, bias, patch_size)
    out = jax.block_until_ready(out)

    # Reference: nn.Conv2d(stride=kernel=patch) forward, f32.
    N = batch * window
    x_flat = x.reshape(N, in_channels, img_size, img_size)
    ref = jax.lax.conv_general_dilated(
        x_flat, weight, window_strides=(patch_size, patch_size), padding="VALID",
        dimension_numbers=("NCHW", "OIHW", "NCHW"))
    ref = ref + bias[None, :, None, None]
    ref = ref.reshape(N, emb_size, -1).transpose(0, 2, 1)

    assert out.shape == ref.shape
    # bf16 MXU operands (f32 accumulation) -> looser tolerance than pure-f32.
    max_err = float(jnp.max(jnp.abs(out - ref)))
    assert jnp.allclose(out, ref, atol=2e-2, rtol=2e-2), max_err

    print("KERNEL_OK")
</pallas_src>

<mosaic_0001>
module attributes {stable_mosaic.version = 11 : i64} {
  func.func @_patch_proj_kernel(%arg0: i32, %arg1: memref<16x256xbf16, #tpu.memory_space<vmem>>, %arg2: memref<256x128xbf16, #tpu.memory_space<vmem>>, %arg3: memref<1x128xf32, #tpu.memory_space<vmem>>, %arg4: memref<16x128xf32, #tpu.memory_space<vmem>>) attributes {dimension_semantics = [#tpu.dimension_semantics<parallel>], iteration_bounds = array<i64: 1>, scalar_prefetch = 0 : i64, scratch_operands = 0 : i64, tpu.core_type = #tpu.core_type<tc>, window_params = [{transform_indices = @transform_0, window_bounds = array<i64: 16, 256>}, {pipeline_mode = #tpu.pipeline_mode<synchronous>, transform_indices = @transform_1, window_bounds = array<i64: 256, 128>}, {pipeline_mode = #tpu.pipeline_mode<synchronous>, transform_indices = @transform_2, window_bounds = array<i64: 1, 128>}, {transform_indices = @transform_3, window_bounds = array<i64: 16, 128>}]} {
    %c0 = arith.constant 0 : index
    %c0_0 = arith.constant 0 : index
    %0 = vector.load %arg1[%c0, %c0_0] : memref<16x256xbf16, #tpu.memory_space<vmem>>, vector<16x256xbf16>
    %c0_1 = arith.constant 0 : index
    %c0_2 = arith.constant 0 : index
    %1 = vector.load %arg2[%c0_1, %c0_2] : memref<256x128xbf16, #tpu.memory_space<vmem>>, vector<256x128xbf16>
    %cst = arith.constant dense<0.000000e+00> : vector<16x128xf32>
    %2 = tpu.matmul %0, %1, %cst {dimension_numbers = #tpu.dot_dimension_numbers<[1], [0], [0], [1], [0, 0, 1, 1], [], []>} : vector<16x256xbf16>, vector<256x128xbf16>, vector<16x128xf32> -> vector<16x128xf32>
    %c0_3 = arith.constant 0 : index
    %c0_4 = arith.constant 0 : index
    %3 = vector.load %arg3[%c0_3, %c0_4] : memref<1x128xf32, #tpu.memory_space<vmem>>, vector<1x128xf32>
    %4 = vector.broadcast %3 : vector<1x128xf32> to vector<16x128xf32>
    %5 = arith.addf %2, %4 : vector<16x128xf32>
    %c0_5 = arith.constant 0 : index
    %c0_6 = arith.constant 0 : index
    %6 = vector.load %arg4[%c0_5, %c0_6] : memref<16x128xf32, #tpu.memory_space<vmem>>, vector<16x128xf32>
    tpu.vector_store %arg4[%c0_5, %c0_6], %5 {strides = array<i32>} : memref<16x128xf32, #tpu.memory_space<vmem>>, vector<16x128xf32>,
    return
  }
  func.func @transform_0(%arg0: i32) -> (i32, i32) {
    %c0_i32 = arith.constant 0 : i32
    %c0_i32_0 = arith.constant 0 : i32
    return %arg0, %c0_i32 : i32, i32
  }
  func.func @transform_1(%arg0: i32) -> (i32, i32) {
    %c0_i32 = arith.constant 0 : i32
    %c0_i32_0 = arith.constant 0 : i32
    %c0_i32_1 = arith.constant 0 : i32
    return %c0_i32, %c0_i32_0 : i32, i32
  }
  func.func @transform_2(%arg0: i32) -> (i32, i32) {
    %c0_i32 = arith.constant 0 : i32
    %c0_i32_0 = arith.constant 0 : i32
    %c0_i32_1 = arith.constant 0 : i32
    return %c0_i32, %c0_i32_0 : i32, i32
  }
  func.func @transform_3(%arg0: i32) -> (i32, i32) {
    %c0_i32 = arith.constant 0 : i32
    %c0_i32_0 = arith.constant 0 : i32
    return %arg0, %c0_i32 : i32, i32
  }
}

</mosaic_0001>

<llo_original>
// kernel: patch_embedding_forward.1
$region0: #{patch_embedding_forward.1}
  #allocation0 [shape = 'u32[]', space=smem, size = 0x4, offset = 0x4, fixed_abs, tag = 'smem constant byte address 0x4 - core index']
  #allocation1 [shape = 'u32[72,128]{1,0:T(1,128)}', space=vmem, size = 0x9000, scoped, tag = 'internal scratch']
  %s0 = inlined_call_operand.vmem [shape: bf16[16,256], index: 0, kind: input, shape index: {}]
  %s1 = inlined_call_operand.vmem [shape: bf16[256,128], index: 1, kind: input, shape index: {}]
  %s2 = inlined_call_operand.vmem [shape: f32[1,128], index: 2, kind: input, shape index: {}]
  %s3 = inlined_call_operand.hbm [shape: f32[16,128], index: 3, kind: output, shape index: {}]
  %s4 = sld [smem:[#allocation0]]
  $region22: #{patch_embedding_forward.1} parent=0
    _
  %s6 = ssub.s32 1, %s4
  %s7 = scalar_select 0, %s6, %s4
  $region1: #{patch_embedding_forward.1} parent=0
    #allocation2 [shape = 'u8[8192]{0}', space=vmem, size = 0x2000, scoped, tag = 'output window, operand 0, single buffered']
    #allocation3 [shape = 's32[1]{0}', space=sflag, size = 0x4, scoped, tag = 'scoped memory for patch_embedding_forward.1']
    %8 = vsyncpa [#allocation3], 0
    // Predicated region
    $region2: #{patch_embedding_forward.1} parent=1 // pred_check
      _
    $region3: #{patch_embedding_forward.1} parent=1 // pred_check_branch
      %10 = sbr.rel (0) target = $region5
    $region4: #{patch_embedding_forward.1} parent=1 // pred_region
      _
    $region5: #{patch_embedding_forward.1} parent=1 // pred_fallthru
      _
    // Predicated region
    $region6: #{patch_embedding_forward.1} parent=1 // pred_check
      _
    $region7: #{patch_embedding_forward.1} parent=1 // pred_check_branch
      %12 = sbr.rel (0) target = $region9
    $region8: #{patch_embedding_forward.1} parent=1 // pred_region
      _
    $region9: #{patch_embedding_forward.1} parent=1 // pred_fallthru
      _
    // Predicated region
    $region10: #{patch_embedding_forward.1} parent=1 // pred_check
      _
    $region11: #{patch_embedding_forward.1} parent=1 // pred_check_branch
      %14 = sbr.rel (0) target = $region13
    $region12: #{patch_embedding_forward.1} parent=1 // pred_region
      _
    $region13: #{patch_embedding_forward.1} parent=1 // pred_fallthru
      _
    %v15 = vld [vmem:[%s0] sm:$0xff]
    %v16 = vld [vmem:[%s0 + $0x8] sm:$0xff]
    %v17 = vld [vmem:[%s1] sm:$0xf]
    %v18 = vld [vmem:[%s1 + $0x4] sm:$0xf]
    %v19 = vld [vmem:[%s1 + $0x8] sm:$0xf]
    %v20 = vld [vmem:[%s1 + $0xc] sm:$0xf]
    %v21 = vld [vmem:[%s1 + $0x10] sm:$0xf]
    %v22 = vld [vmem:[%s1 + $0x14] sm:$0xf]
    %v23 = vld [vmem:[%s1 + $0x18] sm:$0xf]
    %v24 = vld [vmem:[%s1 + $0x1c] sm:$0xf]
    %v25 = vld [vmem:[%s1 + $0x20] sm:$0xf]
    %v26 = vld [vmem:[%s1 + $0x24] sm:$0xf]
    %v27 = vld [vmem:[%s1 + $0x28] sm:$0xf]
    %v28 = vld [vmem:[%s1 + $0x2c] sm:$0xf]
    %v29 = vld [vmem:[%s1 + $0x30] sm:$0xf]
    %v30 = vld [vmem:[%s1 + $0x34] sm:$0xf]
    %v31 = vld [vmem:[%s1 + $0x38] sm:$0xf]
    %v32 = vld [vmem:[%s1 + $0x3c] sm:$0xf]
    %v33 = vld [vmem:[%s1 + $0x40] sm:$0xf]
    %v34 = vld [vmem:[%s1 + $0x44] sm:$0xf]
    %v35 = vld [vmem:[%s1 + $0x48] sm:$0xf]
    %v36 = vld [vmem:[%s1 + $0x4c] sm:$0xf]
    %v37 = vld [vmem:[%s1 + $0x50] sm:$0xf]
    %v38 = vld [vmem:[%s1 + $0x54] sm:$0xf]
    %v39 = vld [vmem:[%s1 + $0x58] sm:$0xf]
    %v40 = vld [vmem:[%s1 + $0x5c] sm:$0xf]
    %v41 = vld [vmem:[%s1 + $0x60] sm:$0xf]
    %v42 = vld [vmem:[%s1 + $0x64] sm:$0xf]
    %v43 = vld [vmem:[%s1 + $0x68] sm:$0xf]
    %v44 = vld [vmem:[%s1 + $0x6c] sm:$0xf]
    %v45 = vld [vmem:[%s1 + $0x70] sm:$0xf]
    %v46 = vld [vmem:[%s1 + $0x74] sm:$0xf]
    %v47 = vld [vmem:[%s1 + $0x78] sm:$0xf]
    %v48 = vld [vmem:[%s1 + $0x7c] sm:$0xf]
    %v49 = vld [vmem:[%s2] sm:$0x1]
    %v51 = vperm.slane %v49, 0
    %v55 = vunpack.c.l.b16 %v15
    %v56 = vunpack.c.h.b16 %v15
    %v57 = vunpack.c.l.b16 %v16
    %v58 = vunpack.c.h.b16 %v16
    %v59 = vpack.c.b16 %v57, %v55
    %v60 = vpack.c.b16 %v58, %v56
    %v95 = vunpack.c.l.b16 %v17
    %v96 = vunpack.c.l.b16 %v18
    %v97 = vunpack.c.l.b16 %v19
    %v98 = vunpack.c.l.b16 %v20
    %v99 = vunpack.c.l.b16 %v21
    %v100 = vunpack.c.l.b16 %v22
    %v101 = vunpack.c.l.b16 %v23
    %v102 = vunpack.c.l.b16 %v24
    %v103 = vunpack.c.l.b16 %v25
    %v104 = vunpack.c.l.b16 %v26
    %v105 = vunpack.c.l.b16 %v27
    %v106 = vunpack.c.l.b16 %v28
    %v107 = vunpack.c.l.b16 %v29
    %v108 = vunpack.c.l.b16 %v30
    %v109 = vunpack.c.l.b16 %v31
    %v110 = vunpack.c.l.b16 %v32
    %v111 = vunpack.c.l.b16 %v33
    %v112 = vunpack.c.l.b16 %v34
    %v113 = vunpack.c.l.b16 %v35
    %v114 = vunpack.c.l.b16 %v36
    %v115 = vunpack.c.l.b16 %v37
    %v116 = vunpack.c.l.b16 %v38
    %v117 = vunpack.c.l.b16 %v39
    %v118 = vunpack.c.l.b16 %v40
    %v119 = vunpack.c.l.b16 %v41
    %v120 = vunpack.c.l.b16 %v42
    %v121 = vunpack.c.l.b16 %v43
    %v122 = vunpack.c.l.b16 %v44
    %v123 = vunpack.c.l.b16 %v45
    %v124 = vunpack.c.l.b16 %v46
    %v125 = vunpack.c.l.b16 %v47
    %v126 = vunpack.c.l.b16 %v48
    %v127 = vpack.c.b16 %v96, %v95
    %v128 = vpack.c.b16 %v98, %v97
    %v129 = vpack.c.b16 %v100, %v99
    %v130 = vpack.c.b16 %v102, %v101
    %v131 = vpack.c.b16 %v104, %v103
    %v132 = vpack.c.b16 %v106, %v105
    %v133 = vpack.c.b16 %v108, %v107
    %v134 = vpack.c.b16 %v110, %v109
    %v135 = vpack.c.b16 %v112, %v111
    %v136 = vpack.c.b16 %v114, %v113
    %v137 = vpack.c.b16 %v116, %v115
    %v138 = vpack.c.b16 %v118, %v117
    %v139 = vpack.c.b16 %v120, %v119
    %v140 = vpack.c.b16 %v122, %v121
    %v141 = vpack.c.b16 %v124, %v123
    %v142 = vpack.c.b16 %v126, %v125
    %159 = vmatpush.bf16.msra.mxu0 %v134
    %160 = vmatpush.bf16.msra.mxu0 %v133
    %161 = vmatpush.bf16.msra.mxu0 %v132
    %162 = vmatpush.bf16.msra.mxu0 %v131
    %163 = vmatpush.bf16.msra.mxu0 %v130
    %164 = vmatpush.bf16.msra.mxu0 %v129
    %165 = vmatpush.bf16.msra.mxu0 %v128
    %166 = vmatpush.bf16.msra.mxu0 %v127
    %167 = vmatmul.bf16.gmra.mxu0 %v59
    %v168 = vpop.f32.mrf.mxu0
    %v169 = vadd.f32 %v51, %v168
    %v170 = vpop.f32.mrf.mxu0
    %v171 = vadd.f32 %v51, %v170
    %172 = vdwg.mxu0
    %173 = vmatpush.bf16.msra.mxu0 %v142
    %174 = vmatpush.bf16.msra.mxu0 %v141
    %175 = vmatpush.bf16.msra.mxu0 %v140
    %176 = vmatpush.bf16.msra.mxu0 %v139
    %177 = vmatpush.bf16.msra.mxu0 %v138
    %178 = vmatpush.bf16.msra.mxu0 %v137
    %179 = vmatpush.bf16.msra.mxu0 %v136
    %180 = vmatpush.bf16.msra.mxu0 %v135
    %181 = vmatmul.bf16.gmra.mxu0 %v60
    %v182 = vpop.f32.mrf.mxu0
    %v183 = vadd.f32 %v169, %v182
    %v184 = vpop.f32.mrf.mxu0
    %v185 = vadd.f32 %v171, %v184
    %186 = vdwg.mxu0
    %187 = vst [vmem:[#allocation2] sm:$0xff] %v183
    %188 = vst [vmem:[#allocation2 + $0x8] sm:$0xff] %v185
    // Predicated region
    $region14: #{patch_embedding_forward.1} parent=1 // pred_check
      _
    $region15: #{patch_embedding_forward.1} parent=1 // pred_check_branch
      %190 = sbr.rel (0) target = $region17
    $region16: #{patch_embedding_forward.1} parent=1 // pred_region
      %192 = vsyncadd [#allocation3], 0
      %s193 = sshll.u32 [#allocation2], 4
      %s194 = int_to_ptr.vmem [resolvable:$true] %s193
      %s195 = sshll.u32 %s3, 4
      %s196 = int_to_ptr.hbm [resolvable:$true] %s195
      %201 = dma.vmem_to_hbm [thread:$0]  %s194, 256, %s196, [#allocation3], 128, 128, 8
    $region17: #{patch_embedding_forward.1} parent=1 // pred_fallthru
      _
    // Predicated region
    $region18: #{patch_embedding_forward.1} parent=1 // pred_check
      _
    $region19: #{patch_embedding_forward.1} parent=1 // pred_check_branch
      %203 = sbr.rel (0) target = $region21
    $region20: #{patch_embedding_forward.1} parent=1 // pred_region
      %205 = dma.done [#allocation3], 256
    $region21: #{patch_embedding_forward.1} parent=1 // pred_fallthru
      _
    %206 = vsyncpa [#allocation3], 1

</llo_original>
